<compile_context>
chip_gen: v7x
topology: tpu7x:2x2x1
jax: 0.10.0
libtpu: 0.0.40
codegen_flags: <defaults>
</compile_context>

<pallas_src>
import jax
import jax.numpy as jnp
from jax.experimental import pallas as pl
from jax.experimental.pallas import tpu as pltpu


# ---------------------------------------------------------------------------
# Fused Pallas kernel: backbone matmul -> neck 1x1 -> concatenated heads
# ---------------------------------------------------------------------------
def _yad_fused_kernel(patch_ref, wb_ref, bb_ref, wn_ref, bn_ref, wh_ref, bh_ref,
                      out_ref):
    # patch_ref: (TP, Kp)     bf16   im2col patches for this row tile
    # wb_ref:    (Kp, C)      bf16   backbone weight      bb_ref: (1, C)    f32
    # wn_ref:    (C, C)       bf16   neck weight          bn_ref: (1, C)    f32
    # wh_ref:    (C, HOUT)    bf16   concat head weights  bh_ref: (1, HOUT) f32
    # out_ref:   (TP, HOUT)   f32    narrow fused head output (bbox|cls|obj|pad)
    feat = jnp.dot(patch_ref[...], wb_ref[...], preferred_element_type=jnp.float32)
    feat = jnp.maximum(feat + bb_ref[...], 0.0)                       # backbone ReLU (f32)
    neck = jnp.dot(feat.astype(wn_ref.dtype), wn_ref[...],
                   preferred_element_type=jnp.float32)
    neck = jnp.maximum(neck + bn_ref[...], 0.0)                       # neck ReLU (f32)
    heads = jnp.dot(neck.astype(wh_ref.dtype), wh_ref[...],
                    preferred_element_type=jnp.float32)
    out_ref[...] = heads + bh_ref[...]


# ---------------------------------------------------------------------------
# Glue: im2col for 3x3 / stride-2 / pad-1 conv (pure slicing, no compute)
# TODO(synk): fold im2col into the kernel pipeline if Cin grows (the 9x HBM
# blow-up is acceptable only because Cin=3 here).
# ---------------------------------------------------------------------------
def _im2col_3x3_s2_p1(x_nhwc):
    B, H, W, C = x_nhwc.shape
    Ho = (H + 2 - 3) // 2 + 1
    Wo = (W + 2 - 3) // 2 + 1
    xp = jnp.pad(x_nhwc, ((0, 0), (1, 1), (1, 1), (0, 0)))
    cols = []
    for ky in range(3):
        for kx in range(3):
            cols.append(xp[:, ky:ky + 2 * Ho:2, kx:kx + 2 * Wo:2, :])
    patches = jnp.stack(cols, axis=3)                  # (B, Ho, Wo, 9, C)
    return patches.reshape(B * Ho * Wo, 9 * C), Ho, Wo


def _round_up(x, m):
    return ((x + m - 1) // m) * m


def _dim_semantics():
    # v7x has 2 TensorCores/chip: shard the row-tile axis across them.
    # v5e/v6e have a single TC: plain "parallel" (near-zero codegen impact).
    try:
        kind = jax.devices()[0].device_kind.lower()
    except Exception:  # pragma: no cover
        kind = ""
    if "v7" in kind and hasattr(pltpu, "CORE_PARALLEL"):
        return (pltpu.CORE_PARALLEL,)
    return ("parallel",)


# ---------------------------------------------------------------------------
# Parameter construction (deterministic; PyTorch Conv2d weight conventions)
# ---------------------------------------------------------------------------
def init_params(key, in_channels=3, channels=32, num_classes=8):
    ks = jax.random.split(key, 10)
    p = {}
    # PyTorch weight shape: (Cout, Cin, kH, kW)
    p["backbone_w"] = 0.1 * jax.random.normal(ks[0], (channels, in_channels, 3, 3), jnp.float32)
    p["backbone_b"] = 0.1 * jax.random.normal(ks[1], (channels,), jnp.float32)
    p["neck_w"] = 0.1 * jax.random.normal(ks[2], (channels, channels, 1, 1), jnp.float32)
    p["neck_b"] = 0.1 * jax.random.normal(ks[3], (channels,), jnp.float32)
    p["bbox_w"] = 0.1 * jax.random.normal(ks[4], (4, channels, 1, 1), jnp.float32)
    p["bbox_b"] = 0.1 * jax.random.normal(ks[5], (4,), jnp.float32)
    p["cls_w"] = 0.1 * jax.random.normal(ks[6], (num_classes, channels, 1, 1), jnp.float32)
    p["cls_b"] = 0.1 * jax.random.normal(ks[7], (num_classes,), jnp.float32)
    p["obj_w"] = 0.1 * jax.random.normal(ks[8], (1, channels, 1, 1), jnp.float32)
    p["obj_b"] = 0.1 * jax.random.normal(ks[9], (1,), jnp.float32)
    return p


def _make_anchor_points(h, w):
    # Mirrors the torch version: stacks (grid_x, grid_y) flattened.
    gy, gx = jnp.meshgrid(jnp.linspace(0.0, 1.0, h), jnp.linspace(0.0, 1.0, w), indexing="ij")
    return jnp.stack([gx.reshape(-1), gy.reshape(-1)], axis=-1)


# ---------------------------------------------------------------------------
# Forward pass (equivalent of YAD.forward)
# ---------------------------------------------------------------------------
@jax.jit
def yad_forward(params, img_nchw):
    B, Cin, H, W = img_nchw.shape
    C = params["backbone_w"].shape[0]
    NC = params["cls_w"].shape[0]
    n_head = 4 + NC + 1                       # bbox | cls | obj concatenated
    HOUT = _round_up(n_head, 16)              # narrow output slab (no 128-lane blow-up)

    # NCHW -> NHWC
    x = jnp.transpose(img_nchw, (0, 2, 3, 1)).astype(jnp.float32)

    # --- im2col for the 3x3 / stride-2 / pad-1 backbone conv ---
    patches, Ho, Wo = _im2col_3x3_s2_p1(x)    # (P, K) with K = 9*Cin
    P, K = patches.shape
    K_pad = _round_up(K, 32)                  # 64 B-aligned patch rows

    # --- tail-friendly row tiling (all sizes are static Python ints) ---
    # P is padded only to a multiple of 128; the tile is chosen so that
    # num_tiles * TILE_P overshoots P128 by less than num_tiles*128 rows.
    TILE_P_MAX = 2048                         # amortizes ~0.35 us/step; fits v7x VMEM
    P128 = _round_up(P, 128)
    blocks128 = P128 // 128
    num_tiles = pl.cdiv(blocks128, TILE_P_MAX // 128)
    TILE_P = pl.cdiv(blocks128, num_tiles) * 128
    P_pad = num_tiles * TILE_P

    patches = jnp.pad(patches, ((0, P_pad - P), (0, K_pad - K)))
    patches_bf = patches.astype(jnp.bfloat16)          # halves the input DMA bytes

    # --- weights: bf16 MXU operands, f32 biases ---
    # (Cout, Cin, kH, kW) -> (kH, kW, Cin, Cout) -> (9*Cin, Cout) (matches im2col tap order)
    wb_mat = jnp.transpose(params["backbone_w"], (2, 3, 1, 0)).reshape(K, C)
    wb_mat = jnp.pad(wb_mat, ((0, K_pad - K), (0, 0))).astype(jnp.bfloat16)
    bb_row = params["backbone_b"].reshape(1, C).astype(jnp.float32)

    def mat1x1(w):  # (Cout, Cin, 1, 1) -> (Cin, Cout)
        return jnp.transpose(w[:, :, 0, 0], (1, 0))

    wn = mat1x1(params["neck_w"]).astype(jnp.bfloat16)
    bn = params["neck_b"].reshape(1, C).astype(jnp.float32)

    wh = jnp.concatenate([mat1x1(params["bbox_w"]),
                          mat1x1(params["cls_w"]),
                          mat1x1(params["obj_w"])], axis=1)                  # (C, n_head)
    bh = jnp.concatenate([params["bbox_b"], params["cls_b"], params["obj_b"]]).reshape(1, n_head)
    wh = jnp.pad(wh, ((0, 0), (0, HOUT - n_head))).astype(jnp.bfloat16)      # (C, HOUT)
    bh = jnp.pad(bh, ((0, 0), (0, HOUT - n_head))).astype(jnp.float32)       # (1, HOUT)

    flops = 2 * P_pad * (K_pad * C + C * C + C * HOUT)
    bytes_accessed = (P_pad * K_pad * 2 + P_pad * HOUT * 4         # patches in, output slab
                      + K_pad * C * 2 + C * C * 2 + C * HOUT * 2   # bf16 weights
                      + (C + C + HOUT) * 4)                        # f32 biases

    out = pl.pallas_call(
        _yad_fused_kernel,
        grid=(num_tiles,),
        in_specs=[
            pl.BlockSpec((TILE_P, K_pad), lambda i: (i, 0)),    # patches tile (streams)
            pl.BlockSpec((K_pad, C), lambda i: (0, 0)),         # backbone weight (pinned)
            pl.BlockSpec((1, C), lambda i: (0, 0)),
            pl.BlockSpec((C, C), lambda i: (0, 0)),             # neck weight (pinned)
            pl.BlockSpec((1, C), lambda i: (0, 0)),
            pl.BlockSpec((C, HOUT), lambda i: (0, 0)),          # fused head weight (pinned)
            pl.BlockSpec((1, HOUT), lambda i: (0, 0)),
        ],
        out_specs=pl.BlockSpec((TILE_P, HOUT), lambda i: (i, 0)),
        out_shape=jax.ShapeDtypeStruct((P_pad, HOUT), jnp.float32),
        compiler_params=pltpu.CompilerParams(
            dimension_semantics=_dim_semantics(),
            vmem_limit_bytes=32 * 1024 * 1024),   # explicit; well within v7x's 64 MiB physical
        cost_estimate=pl.CostEstimate(flops=flops, transcendentals=0,
                                      bytes_accessed=bytes_accessed),
    )(patches_bf, wb_mat, bb_row, wn, bn, wh, bh)

    # Post-kernel pass only touches the small HOUT-wide slab (8x cheaper than the
    # old 128-lane version). If the consumer is JAX, prefer returning `out[:P, :n_head]`
    # (NHWC rows) directly and skip the NCHW transposes below.
    out = out[:P, :n_head]
    bbox_flat = out[:, :4]
    cls_flat = out[:, 4:4 + NC]
    obj_flat = out[:, 4 + NC:4 + NC + 1]

    def to_nchw(flat, cout):
        return jnp.transpose(flat.reshape(B, Ho, Wo, cout), (0, 3, 1, 2))

    bbox_out = to_nchw(bbox_flat, 4)
    cls_out = to_nchw(cls_flat, NC)
    objectness_out = to_nchw(obj_flat, 1)

    # Anchor-point cache update done by YAD.forward (not returned; DCE'd under jit).
    anchor_points = _make_anchor_points(Ho, Wo)  # noqa: F841  (kept for parity with torch forward)

    return bbox_out, cls_out, objectness_out


# ---------------------------------------------------------------------------
if __name__ == "__main__":
    key = jax.random.PRNGKey(0)
    pkey, xkey = jax.random.split(key)

    B, Cin, H, W = 2, 3, 16, 16
    channels, num_classes = 32, 8

    params = init_params(pkey, in_channels=Cin, channels=channels, num_classes=num_classes)
    img = jax.random.normal(xkey, (B, Cin, H, W), jnp.float32)

    bbox_out, cls_out, objectness_out = yad_forward(params, img)
    jax.block_until_ready((bbox_out, cls_out, objectness_out))

    assert bbox_out.shape == (B, 4, H // 2, W // 2), bbox_out.shape
    assert cls_out.shape == (B, num_classes, H // 2, W // 2), cls_out.shape
    assert objectness_out.shape == (B, 1, H // 2, W // 2), objectness_out.shape

    # Pure-JAX reference (emulating the bf16 MXU-input / f32-accumulate path).
    def ref_forward(p, x_nchw):
        bf = lambda a: a.astype(jnp.bfloat16).astype(jnp.float32)
        x = jnp.transpose(x_nchw, (0, 2, 3, 1)).astype(jnp.float32)
        patches, Ho, Wo = _im2col_3x3_s2_p1(x)
        Bx = x_nchw.shape[0]
        wb = jnp.transpose(p["backbone_w"], (2, 3, 1, 0)).reshape(-1, p["backbone_w"].shape[0])
        feat = jnp.dot(bf(patches), bf(wb), precision="highest") + p["backbone_b"]
        feat = jax.nn.relu(feat)
        wn = p["neck_w"][:, :, 0, 0].T
        neck = jax.nn.relu(jnp.dot(bf(feat), bf(wn), precision="highest") + p["neck_b"])

        def head(w, b):
            return jnp.dot(bf(neck), bf(w[:, :, 0, 0].T), precision="highest") + b

        bbox = head(p["bbox_w"], p["bbox_b"])
        cls = head(p["cls_w"], p["cls_b"])
        obj = head(p["obj_w"], p["obj_b"])

        def t(a, cout):
            return jnp.transpose(a.reshape(Bx, Ho, Wo, cout), (0, 3, 1, 2))

        return t(bbox, 4), t(cls, cls.shape[-1]), t(obj, 1)

    rb, rc, ro = ref_forward(params, img)
    assert jnp.allclose(bbox_out, rb, atol=2e-3, rtol=2e-3), jnp.abs(bbox_out - rb).max()
    assert jnp.allclose(cls_out, rc, atol=2e-3, rtol=2e-3), jnp.abs(cls_out - rc).max()
    assert jnp.allclose(objectness_out, ro, atol=2e-3, rtol=2e-3), jnp.abs(objectness_out - ro).max()

    print("KERNEL_OK")
</pallas_src>

<mosaic_0001>
module attributes {stable_mosaic.version = 11 : i64} {
  func.func @_yad_fused_kernel(%arg0: i32, %arg1: memref<128x32xbf16, #tpu.memory_space<vmem>>, %arg2: memref<32x32xbf16, #tpu.memory_space<vmem>>, %arg3: memref<1x32xf32, #tpu.memory_space<vmem>>, %arg4: memref<32x32xbf16, #tpu.memory_space<vmem>>, %arg5: memref<1x32xf32, #tpu.memory_space<vmem>>, %arg6: memref<32x16xbf16, #tpu.memory_space<vmem>>, %arg7: memref<1x16xf32, #tpu.memory_space<vmem>>, %arg8: memref<128x16xf32, #tpu.memory_space<vmem>>) attributes {dimension_semantics = [#tpu.dimension_semantics<parallel>], iteration_bounds = array<i64: 1>, scalar_prefetch = 0 : i64, scratch_operands = 0 : i64, tpu.core_type = #tpu.core_type<tc>, window_params = [{transform_indices = @transform_0, window_bounds = array<i64: 128, 32>}, {pipeline_mode = #tpu.pipeline_mode<synchronous>, transform_indices = @transform_1, window_bounds = array<i64: 32, 32>}, {pipeline_mode = #tpu.pipeline_mode<synchronous>, transform_indices = @transform_2, window_bounds = array<i64: 1, 32>}, {pipeline_mode = #tpu.pipeline_mode<synchronous>, transform_indices = @transform_3, window_bounds = array<i64: 32, 32>}, {pipeline_mode = #tpu.pipeline_mode<synchronous>, transform_indices = @transform_4, window_bounds = array<i64: 1, 32>}, {pipeline_mode = #tpu.pipeline_mode<synchronous>, transform_indices = @transform_5, window_bounds = array<i64: 32, 16>}, {pipeline_mode = #tpu.pipeline_mode<synchronous>, transform_indices = @transform_6, window_bounds = array<i64: 1, 16>}, {transform_indices = @transform_7, window_bounds = array<i64: 128, 16>}]} {
    %c0 = arith.constant 0 : index
    %c0_0 = arith.constant 0 : index
    %0 = vector.load %arg1[%c0, %c0_0] : memref<128x32xbf16, #tpu.memory_space<vmem>>, vector<128x32xbf16>
    %c0_1 = arith.constant 0 : index
    %c0_2 = arith.constant 0 : index
    %1 = vector.load %arg2[%c0_1, %c0_2] : memref<32x32xbf16, #tpu.memory_space<vmem>>, vector<32x32xbf16>
    %cst = arith.constant dense<0.000000e+00> : vector<128x32xf32>
    %2 = tpu.matmul %0, %1, %cst {dimension_numbers = #tpu.dot_dimension_numbers<[1], [0], [0], [1], [0, 0, 1, 1], [], []>} : vector<128x32xbf16>, vector<32x32xbf16>, vector<128x32xf32> -> vector<128x32xf32>
    %c0_3 = arith.constant 0 : index
    %c0_4 = arith.constant 0 : index
    %3 = vector.load %arg3[%c0_3, %c0_4] : memref<1x32xf32, #tpu.memory_space<vmem>>, vector<1x32xf32>
    %4 = vector.broadcast %3 : vector<1x32xf32> to vector<128x32xf32>
    %5 = arith.addf %2, %4 : vector<128x32xf32>
    %cst_5 = arith.constant 0.000000e+00 : f32
    %6 = vector.broadcast %cst_5 : f32 to vector<128x32xf32>
    %7 = arith.maximumf %5, %6 : vector<128x32xf32>
    %8 = arith.truncf %7 : vector<128x32xf32> to vector<128x32xbf16>
    %c0_6 = arith.constant 0 : index
    %c0_7 = arith.constant 0 : index
    %9 = vector.load %arg4[%c0_6, %c0_7] : memref<32x32xbf16, #tpu.memory_space<vmem>>, vector<32x32xbf16>
    %cst_8 = arith.constant dense<0.000000e+00> : vector<128x32xf32>
    %10 = tpu.matmul %8, %9, %cst_8 {dimension_numbers = #tpu.dot_dimension_numbers<[1], [0], [0], [1], [0, 0, 1, 1], [], []>} : vector<128x32xbf16>, vector<32x32xbf16>, vector<128x32xf32> -> vector<128x32xf32>
    %c0_9 = arith.constant 0 : index
    %c0_10 = arith.constant 0 : index
    %11 = vector.load %arg5[%c0_9, %c0_10] : memref<1x32xf32, #tpu.memory_space<vmem>>, vector<1x32xf32>
    %12 = vector.broadcast %11 : vector<1x32xf32> to vector<128x32xf32>
    %13 = arith.addf %10, %12 : vector<128x32xf32>
    %cst_11 = arith.constant 0.000000e+00 : f32
    %14 = vector.broadcast %cst_11 : f32 to vector<128x32xf32>
    %15 = arith.maximumf %13, %14 : vector<128x32xf32>
    %16 = arith.truncf %15 : vector<128x32xf32> to vector<128x32xbf16>
    %c0_12 = arith.constant 0 : index
    %c0_13 = arith.constant 0 : index
    %17 = vector.load %arg6[%c0_12, %c0_13] : memref<32x16xbf16, #tpu.memory_space<vmem>>, vector<32x16xbf16>
    %cst_14 = arith.constant dense<0.000000e+00> : vector<128x16xf32>
    %18 = tpu.matmul %16, %17, %cst_14 {dimension_numbers = #tpu.dot_dimension_numbers<[1], [0], [0], [1], [0, 0, 1, 1], [], []>} : vector<128x32xbf16>, vector<32x16xbf16>, vector<128x16xf32> -> vector<128x16xf32>
    %c0_15 = arith.constant 0 : index
    %c0_16 = arith.constant 0 : index
    %19 = vector.load %arg7[%c0_15, %c0_16] : memref<1x16xf32, #tpu.memory_space<vmem>>, vector<1x16xf32>
    %20 = vector.broadcast %19 : vector<1x16xf32> to vector<128x16xf32>
    %21 = arith.addf %18, %20 : vector<128x16xf32>
    %c0_17 = arith.constant 0 : index
    %c0_18 = arith.constant 0 : index
    %22 = vector.load %arg8[%c0_17, %c0_18] : memref<128x16xf32, #tpu.memory_space<vmem>>, vector<128x16xf32>
    tpu.vector_store %arg8[%c0_17, %c0_18], %21 {strides = array<i32>} : memref<128x16xf32, #tpu.memory_space<vmem>>, vector<128x16xf32>,
    return
  }
  func.func @transform_0(%arg0: i32) -> (i32, i32) {
    %c0_i32 = arith.constant 0 : i32
    %c0_i32_0 = arith.constant 0 : i32
    return %arg0, %c0_i32 : i32, i32
  }
  func.func @transform_1(%arg0: i32) -> (i32, i32) {
    %c0_i32 = arith.constant 0 : i32
    %c0_i32_0 = arith.constant 0 : i32
    %c0_i32_1 = arith.constant 0 : i32
    return %c0_i32, %c0_i32_0 : i32, i32
  }
  func.func @transform_2(%arg0: i32) -> (i32, i32) {
    %c0_i32 = arith.constant 0 : i32
    %c0_i32_0 = arith.constant 0 : i32
    %c0_i32_1 = arith.constant 0 : i32
    return %c0_i32, %c0_i32_0 : i32, i32
  }
  func.func @transform_3(%arg0: i32) -> (i32, i32) {
    %c0_i32 = arith.constant 0 : i32
    %c0_i32_0 = arith.constant 0 : i32
    %c0_i32_1 = arith.constant 0 : i32
    return %c0_i32, %c0_i32_0 : i32, i32
  }
  func.func @transform_4(%arg0: i32) -> (i32, i32) {
    %c0_i32 = arith.constant 0 : i32
    %c0_i32_0 = arith.constant 0 : i32
    %c0_i32_1 = arith.constant 0 : i32
    return %c0_i32, %c0_i32_0 : i32, i32
  }
  func.func @transform_5(%arg0: i32) -> (i32, i32) {
    %c0_i32 = arith.constant 0 : i32
    %c0_i32_0 = arith.constant 0 : i32
    %c0_i32_1 = arith.constant 0 : i32
    return %c0_i32, %c0_i32_0 : i32, i32
  }
  func.func @transform_6(%arg0: i32) -> (i32, i32) {
    %c0_i32 = arith.constant 0 : i32
    %c0_i32_0 = arith.constant 0 : i32
    %c0_i32_1 = arith.constant 0 : i32
    return %c0_i32, %c0_i32_0 : i32, i32
  }
  func.func @transform_7(%arg0: i32) -> (i32, i32) {
    %c0_i32 = arith.constant 0 : i32
    %c0_i32_0 = arith.constant 0 : i32
    return %arg0, %c0_i32 : i32, i32
  }
}

</mosaic_0001>

<llo_original>
// kernel: yad_forward.1
$region0: #{yad_forward.1}
  #allocation0 [shape = 'u32[]', space=smem, size = 0x4, offset = 0x4, fixed_abs, tag = 'smem constant byte address 0x4 - core index']
  #allocation1 [shape = 'u32[144,128]{1,0:T(1,128)}', space=vmem, size = 0x12000, scoped, tag = 'internal scratch']
  %s0 = inlined_call_operand.vmem [shape: bf16[128,32], index: 0, kind: input, shape index: {}]
  %s1 = inlined_call_operand.vmem [shape: bf16[32,32], index: 1, kind: input, shape index: {}]
  %s2 = inlined_call_operand.vmem [shape: f32[1,32], index: 2, kind: input, shape index: {}]
  %s3 = inlined_call_operand.vmem [shape: bf16[32,32], index: 3, kind: input, shape index: {}]
  %s4 = inlined_call_operand.vmem [shape: f32[1,32], index: 4, kind: input, shape index: {}]
  %s5 = inlined_call_operand.vmem [shape: bf16[32,16], index: 5, kind: input, shape index: {}]
  %s6 = inlined_call_operand.vmem [shape: f32[1,16], index: 6, kind: input, shape index: {}]
  %s7 = inlined_call_operand.vmem [shape: f32[128,16], index: 7, kind: output, shape index: {}]
  %s8 = sld [smem:[#allocation0]]
  $region38: #{yad_forward.1} parent=0
    _
  %s10 = ssub.s32 1, %s8
  %s11 = scalar_select 0, %s10, %s8
  // Predicated region
  $region2: #{yad_forward.1} parent=0 // pred_check
    _
  $region3: #{yad_forward.1} parent=0 // pred_check_branch
    %13 = sbr.rel (0) target = $region5
  $region4: #{yad_forward.1} parent=0 // pred_region
    _
  $region5: #{yad_forward.1} parent=0 // pred_fallthru
    _
  // Predicated region
  $region6: #{yad_forward.1} parent=0 // pred_check
    _
  $region7: #{yad_forward.1} parent=0 // pred_check_branch
    %15 = sbr.rel (0) target = $region9
  $region8: #{yad_forward.1} parent=0 // pred_region
    _
  $region9: #{yad_forward.1} parent=0 // pred_fallthru
    _
  // Predicated region
  $region10: #{yad_forward.1} parent=0 // pred_check
    _
  $region11: #{yad_forward.1} parent=0 // pred_check_branch
    %17 = sbr.rel (0) target = $region13
  $region12: #{yad_forward.1} parent=0 // pred_region
    _
  $region13: #{yad_forward.1} parent=0 // pred_fallthru
    _
  // Predicated region
  $region14: #{yad_forward.1} parent=0 // pred_check
    _
  $region15: #{yad_forward.1} parent=0 // pred_check_branch
    %19 = sbr.rel (0) target = $region17
  $region16: #{yad_forward.1} parent=0 // pred_region
    _
  $region17: #{yad_forward.1} parent=0 // pred_fallthru
    _
  // Predicated region
  $region18: #{yad_forward.1} parent=0 // pred_check
    _
  $region19: #{yad_forward.1} parent=0 // pred_check_branch
    %21 = sbr.rel (0) target = $region21
  $region20: #{yad_forward.1} parent=0 // pred_region
    _
  $region21: #{yad_forward.1} parent=0 // pred_fallthru
    _
  // Predicated region
  $region22: #{yad_forward.1} parent=0 // pred_check
    _
  $region23: #{yad_forward.1} parent=0 // pred_check_branch
    %23 = sbr.rel (0) target = $region25
  $region24: #{yad_forward.1} parent=0 // pred_region
    _
  $region25: #{yad_forward.1} parent=0 // pred_fallthru
    _
  // Predicated region
  $region26: #{yad_forward.1} parent=0 // pred_check
    _
  $region27: #{yad_forward.1} parent=0 // pred_check_branch
    %25 = sbr.rel (0) target = $region29
  $region28: #{yad_forward.1} parent=0 // pred_region
    _
  $region29: #{yad_forward.1} parent=0 // pred_fallthru
    _
  %v27 = vld [vmem:[%s0] sm:$0xf]
  %v28 = vld [vmem:[%s0 + $0x4] sm:$0xf]
  %v29 = vld [vmem:[%s0 + $0x8] sm:$0xf]
  %v30 = vld [vmem:[%s0 + $0xc] sm:$0xf]
  %v31 = vld [vmem:[%s0 + $0x10] sm:$0xf]
  %v32 = vld [vmem:[%s0 + $0x14] sm:$0xf]
  %v33 = vld [vmem:[%s0 + $0x18] sm:$0xf]
  %v34 = vld [vmem:[%s0 + $0x1c] sm:$0xf]
  %v35 = vld [vmem:[%s0 + $0x20] sm:$0xf]
  %v36 = vld [vmem:[%s0 + $0x24] sm:$0xf]
  %v37 = vld [vmem:[%s0 + $0x28] sm:$0xf]
  %v38 = vld [vmem:[%s0 + $0x2c] sm:$0xf]
  %v39 = vld [vmem:[%s0 + $0x30] sm:$0xf]
  %v40 = vld [vmem:[%s0 + $0x34] sm:$0xf]
  %v41 = vld [vmem:[%s0 + $0x38] sm:$0xf]
  %v42 = vld [vmem:[%s0 + $0x3c] sm:$0xf]
  %v43 = vld [vmem:[%s1] sm:$0xf]
  %v44 = vld [vmem:[%s1 + $0x4] sm:$0xf]
  %v45 = vld [vmem:[%s1 + $0x8] sm:$0xf]
  %v46 = vld [vmem:[%s1 + $0xc] sm:$0xf]
  %v47 = vld [vmem:[%s2] sm:$0x1]
  %v49 = vlaneseq
  %v50 = vshrl.u32 %v49, 7
  %v51 = vsub.s32 0, %v50
  %v52 = vrot.slane %v47, %v51
  %v70 = vunpack.c.l.b16 %v27
  %v71 = vunpack.c.l.b16 %v28
  %v72 = vunpack.c.l.b16 %v29
  %v73 = vunpack.c.l.b16 %v30
  %v74 = vunpack.c.l.b16 %v31
  %v75 = vunpack.c.l.b16 %v32
  %v76 = vunpack.c.l.b16 %v33
  %v77 = vunpack.c.l.b16 %v34
  %v78 = vunpack.c.l.b16 %v35
  %v79 = vunpack.c.l.b16 %v36
  %v80 = vunpack.c.l.b16 %v37
  %v81 = vunpack.c.l.b16 %v38
  %v82 = vunpack.c.l.b16 %v39
  %v83 = vunpack.c.l.b16 %v40
  %v84 = vunpack.c.l.b16 %v41
  %v85 = vunpack.c.l.b16 %v42
  %v86 = vpack.c.b16 %v71, %v70
  %v87 = vpack.c.b16 %v73, %v72
  %v88 = vpack.c.b16 %v75, %v74
  %v89 = vpack.c.b16 %v77, %v76
  %v90 = vpack.c.b16 %v79, %v78
  %v91 = vpack.c.b16 %v81, %v80
  %v92 = vpack.c.b16 %v83, %v82
  %v93 = vpack.c.b16 %v85, %v84
  %v98 = vunpack.c.l.b16 %v43
  %v99 = vunpack.c.l.b16 %v44
  %v100 = vunpack.c.l.b16 %v45
  %v101 = vunpack.c.l.b16 %v46
  %v102 = vpack.c.b16 %v99, %v98
  %v103 = vpack.c.b16 %v101, %v100
  %vm106 = vcmask 261120
  %v108 = vsel %vm106, %v86, 0
  %v111 = vsel %vm106, %v87, 0
  %v114 = vsel %vm106, %v88, 0
  %v117 = vsel %vm106, %v89, 0
  %v120 = vsel %vm106, %v90, 0
  %v123 = vsel %vm106, %v91, 0
  %v126 = vsel %vm106, %v92, 0
  %v129 = vsel %vm106, %v93, 0
  %131 = vmatprep.subr.bf16.mxu0 0
  %132 = vmatpush1.bf16.msra.mxu0 %v102
  %133 = vmatprep.subr.bf16.mxu0 0
  %134 = vmatpush1.bf16.msra.mxu0 %v103
  %135 = vmatprep.subr.bf16.mxu0 0
  %136 = vmatpush1.bf16.msra.mxu0 0
  %137 = vmatprep.subr.bf16.mxu0 0
  %138 = vmatpush1.bf16.msra.mxu0 0
  %139 = vmatprep.subr.bf16.mxu0 0
  %140 = vmatpush1.bf16.msra.mxu0 0
  %141 = vmatprep.subr.bf16.mxu0 0
  %142 = vmatpush1.bf16.msra.mxu0 0
  %143 = vmatprep.subr.bf16.mxu0 0
  %144 = vmatpush1.bf16.msra.mxu0 0
  %145 = vmatprep.subr.bf16.mxu0 0
  %146 = vmatpush1.bf16.msra.mxu0 0
  %147 = vmatprep.subr.bf16.mxu0 0
  %148 = vmatpush1.bf16.msra.mxu0 0
  %149 = vmatprep.subr.bf16.mxu0 0
  %150 = vmatpush1.bf16.msra.mxu0 0
  %151 = vmatprep.subr.bf16.mxu0 0
  %152 = vmatpush1.bf16.msra.mxu0 0
  %153 = vmatprep.subr.bf16.mxu0 0
  %154 = vmatpush1.bf16.msra.mxu0 0
  %155 = vmatprep.subr.bf16.mxu0 0
  %156 = vmatpush1.bf16.msra.mxu0 0
  %157 = vmatprep.subr.bf16.mxu0 0
  %158 = vmatpush1.bf16.msra.mxu0 0
  %159 = vmatprep.subr.bf16.mxu0 0
  %160 = vmatpush1.bf16.msra.mxu0 0
  %161 = vmatprep.subr.bf16.mxu0 0
  %162 = vmatpush1.bf16.msra.mxu0 0
  %163 = vmatprep.mubr.bf16.mxu0 0
  %164 = vmatmul.mubr.bf16.gmra.mrb[0].mxu0 %v108
  %v165 = vpop.f32.mrb[0].mxu0
  %v166 = vadd.f32 %v52, %v165
  %v167 = vpop.f32.mrb[0].mxu0
  %v168 = vpop.f32.mrb[0].mxu0
  %v169 = vadd.f32 %v52, %v168
  %v170 = vpop.f32.mrb[0].mxu0
  %171 = vmatprep.mubr.bf16.mxu0 0
  %172 = vmatmul.mubr.bf16.gmra.mrb[0].mxu0 %v111
  %v173 = vpop.f32.mrb[0].mxu0
  %v174 = vadd.f32 %v52, %v173
  %v175 = vpop.f32.mrb[0].mxu0
  %v176 = vpop.f32.mrb[0].mxu0
  %v177 = vadd.f32 %v52, %v176
  %v178 = vpop.f32.mrb[0].mxu0
  %179 = vmatprep.mubr.bf16.mxu0 0
  %180 = vmatmul.mubr.bf16.gmra.mrb[0].mxu0 %v114
  %v181 = vpop.f32.mrb[0].mxu0
  %v182 = vadd.f32 %v52, %v181
  %v183 = vpop.f32.mrb[0].mxu0
  %v184 = vpop.f32.mrb[0].mxu0
  %v185 = vadd.f32 %v52, %v184
  %v186 = vpop.f32.mrb[0].mxu0
  %187 = vmatprep.mubr.bf16.mxu0 0
  %188 = vmatmul.mubr.bf16.gmra.mrb[0].mxu0 %v117
  %v189 = vpop.f32.mrb[0].mxu0
  %v190 = vadd.f32 %v52, %v189
  %v191 = vpop.f32.mrb[0].mxu0
  %v192 = vpop.f32.mrb[0].mxu0
  %v193 = vadd.f32 %v52, %v192
  %v194 = vpop.f32.mrb[0].mxu0
  %195 = vmatprep.mubr.bf16.mxu0 0
  %196 = vmatmul.mubr.bf16.gmra.mrb[0].mxu0 %v120
  %v197 = vpop.f32.mrb[0].mxu0
  %v198 = vadd.f32 %v52, %v197
  %v199 = vpop.f32.mrb[0].mxu0
  %v200 = vpop.f32.mrb[0].mxu0
  %v201 = vadd.f32 %v52, %v200
  %v202 = vpop.f32.mrb[0].mxu0
  %203 = vmatprep.mubr.bf16.mxu0 0
  %204 = vmatmul.mubr.bf16.gmra.mrb[0].mxu0 %v123
  %v205 = vpop.f32.mrb[0].mxu0
  %v206 = vadd.f32 %v52, %v205
  %v207 = vpop.f32.mrb[0].mxu0
  %v208 = vpop.f32.mrb[0].mxu0
  %v209 = vadd.f32 %v52, %v208
  %v210 = vpop.f32.mrb[0].mxu0
  %211 = vmatprep.mubr.bf16.mxu0 0
  %212 = vmatmul.mubr.bf16.gmra.mrb[0].mxu0 %v126
  %v213 = vpop.f32.mrb[0].mxu0
  %v214 = vadd.f32 %v52, %v213
  %v215 = vpop.f32.mrb[0].mxu0
  %v216 = vpop.f32.mrb[0].mxu0
  %v217 = vadd.f32 %v52, %v216
  %v218 = vpop.f32.mrb[0].mxu0
  %219 = vmatprep.mubr.bf16.mxu0 0
  %220 = vmatmul.mubr.bf16.gmra.mrb[0].mxu0 %v129
  %v221 = vpop.f32.mrb[0].mxu0
  %v222 = vadd.f32 %v52, %v221
  %v223 = vpop.f32.mrb[0].mxu0
  %v224 = vpop.f32.mrb[0].mxu0
  %v225 = vadd.f32 %v52, %v224
  %v226 = vpop.f32.mrb[0].mxu0
  %227 = vdwg.mxu0
  %v228 = vmax.f32 %v166, 0.0
  %v229 = vmax.f32 %v169, 0.0
  %v230 = vmax.f32 %v174, 0.0
  %v231 = vmax.f32 %v177, 0.0
  %v232 = vmax.f32 %v182, 0.0
  %v233 = vmax.f32 %v185, 0.0
  %v234 = vmax.f32 %v190, 0.0
  %v235 = vmax.f32 %v193, 0.0
  %v236 = vmax.f32 %v198, 0.0
  %v237 = vmax.f32 %v201, 0.0
  %v238 = vmax.f32 %v206, 0.0
  %v239 = vmax.f32 %v209, 0.0
  %v240 = vmax.f32 %v214, 0.0
  %v241 = vmax.f32 %v217, 0.0
  %v242 = vmax.f32 %v222, 0.0
  %v243 = vmax.f32 %v225, 0.0
  %v244 = vpack.c.bf16 %v229, %v228
  %v245 = vpack.c.bf16 %v231, %v230
  %v246 = vpack.c.bf16 %v233, %v232
  %v247 = vpack.c.bf16 %v235, %v234
  %v248 = vpack.c.bf16 %v237, %v236
  %v249 = vpack.c.bf16 %v239, %v238
  %v250 = vpack.c.bf16 %v241, %v240
  %v251 = vpack.c.bf16 %v243, %v242
  %v252 = vld [vmem:[%s3] sm:$0xf]
  %v253 = vld [vmem:[%s3 + $0x4] sm:$0xf]
  %v254 = vld [vmem:[%s3 + $0x8] sm:$0xf]
  %v255 = vld [vmem:[%s3 + $0xc] sm:$0xf]
  %v256 = vld [vmem:[%s4] sm:$0x1]
  %v258 = vlaneseq
  %v259 = vshrl.u32 %v258, 7
  %v260 = vsub.s32 0, %v259
  %v261 = vrot.slane %v256, %v260
  %v267 = vunpack.c.l.b16 %v252
  %v268 = vunpack.c.l.b16 %v253
  %v269 = vunpack.c.l.b16 %v254
  %v270 = vunpack.c.l.b16 %v255
  %v271 = vpack.c.b16 %v268, %v267
  %v272 = vpack.c.b16 %v270, %v269
  %v276 = vsel %vm106, %v244, 0
  %v279 = vsel %vm106, %v245, 0
  %v282 = vsel %vm106, %v246, 0
  %v285 = vsel %vm106, %v247, 0
  %v288 = vsel %vm106, %v248, 0
  %v291 = vsel %vm106, %v249, 0
  %v294 = vsel %vm106, %v250, 0
  %v297 = vsel %vm106, %v251, 0
  %299 = vmatprep.subr.bf16.mxu0 0
  %300 = vmatpush1.bf16.msra.mxu0 %v271
  %301 = vmatprep.subr.bf16.mxu0 0
  %302 = vmatpush1.bf16.msra.mxu0 %v272
  %303 = vmatprep.subr.bf16.mxu0 0
  %304 = vmatpush1.bf16.msra.mxu0 0
  %305 = vmatprep.subr.bf16.mxu0 0
  %306 = vmatpush1.bf16.msra.mxu0 0
  %307 = vmatprep.subr.bf16.mxu0 0
  %308 = vmatpush1.bf16.msra.mxu0 0
  %309 = vmatprep.subr.bf16.mxu0 0
  %310 = vmatpush1.bf16.msra.mxu0 0
  %311 = vmatprep.subr.bf16.mxu0 0
  %312 = vmatpush1.bf16.msra.mxu0 0
  %313 = vmatprep.subr.bf16.mxu0 0
  %314 = vmatpush1.bf16.msra.mxu0 0
  %315 = vmatprep.subr.bf16.mxu0 0
  %316 = vmatpush1.bf16.msra.mxu0 0
  %317 = vmatprep.subr.bf16.mxu0 0
  %318 = vmatpush1.bf16.msra.mxu0 0
  %319 = vmatprep.subr.bf16.mxu0 0
  %320 = vmatpush1.bf16.msra.mxu0 0
  %321 = vmatprep.subr.bf16.mxu0 0
  %322 = vmatpush1.bf16.msra.mxu0 0
  %323 = vmatprep.subr.bf16.mxu0 0
  %324 = vmatpush1.bf16.msra.mxu0 0
  %325 = vmatprep.subr.bf16.mxu0 0
  %326 = vmatpush1.bf16.msra.mxu0 0
  %327 = vmatprep.subr.bf16.mxu0 0
  %328 = vmatpush1.bf16.msra.mxu0 0
  %329 = vmatprep.subr.bf16.mxu0 0
  %330 = vmatpush1.bf16.msra.mxu0 0
  %331 = vmatprep.mubr.bf16.mxu0 0
  %332 = vmatmul.mubr.bf16.gmra.mrb[0].mxu0 %v276
  %v333 = vpop.f32.mrb[0].mxu0
  %v334 = vadd.f32 %v261, %v333
  %v335 = vpop.f32.mrb[0].mxu0
  %v336 = vpop.f32.mrb[0].mxu0
  %v337 = vadd.f32 %v261, %v336
  %v338 = vpop.f32.mrb[0].mxu0
  %339 = vmatprep.mubr.bf16.mxu0 0
  %340 = vmatmul.mubr.bf16.gmra.mrb[0].mxu0 %v279
  %v341 = vpop.f32.mrb[0].mxu0
  %v342 = vadd.f32 %v261, %v341
  %v343 = vpop.f32.mrb[0].mxu0
  %v344 = vpop.f32.mrb[0].mxu0
  %v345 = vadd.f32 %v261, %v344
  %v346 = vpop.f32.mrb[0].mxu0
  %347 = vmatprep.mubr.bf16.mxu0 0
  %348 = vmatmul.mubr.bf16.gmra.mrb[0].mxu0 %v282
  %v349 = vpop.f32.mrb[0].mxu0
  %v350 = vadd.f32 %v261, %v349
  %v351 = vpop.f32.mrb[0].mxu0
  %v352 = vpop.f32.mrb[0].mxu0
  %v353 = vadd.f32 %v261, %v352
  %v354 = vpop.f32.mrb[0].mxu0
  %355 = vmatprep.mubr.bf16.mxu0 0
  %356 = vmatmul.mubr.bf16.gmra.mrb[0].mxu0 %v285
  %v357 = vpop.f32.mrb[0].mxu0
  %v358 = vadd.f32 %v261, %v357
  %v359 = vpop.f32.mrb[0].mxu0
  %v360 = vpop.f32.mrb[0].mxu0
  %v361 = vadd.f32 %v261, %v360
  %v362 = vpop.f32.mrb[0].mxu0
  %363 = vmatprep.mubr.bf16.mxu0 0
  %364 = vmatmul.mubr.bf16.gmra.mrb[0].mxu0 %v288
  %v365 = vpop.f32.mrb[0].mxu0
  %v366 = vadd.f32 %v261, %v365
  %v367 = vpop.f32.mrb[0].mxu0
  %v368 = vpop.f32.mrb[0].mxu0
  %v369 = vadd.f32 %v261, %v368
  %v370 = vpop.f32.mrb[0].mxu0
  %371 = vmatprep.mubr.bf16.mxu0 0
  %372 = vmatmul.mubr.bf16.gmra.mrb[0].mxu0 %v291
  %v373 = vpop.f32.mrb[0].mxu0
  %v374 = vadd.f32 %v261, %v373
  %v375 = vpop.f32.mrb[0].mxu0
  %v376 = vpop.f32.mrb[0].mxu0
  %v377 = vadd.f32 %v261, %v376
  %v378 = vpop.f32.mrb[0].mxu0
  %379 = vmatprep.mubr.bf16.mxu0 0
  %380 = vmatmul.mubr.bf16.gmra.mrb[0].mxu0 %v294
  %v381 = vpop.f32.mrb[0].mxu0
  %v382 = vadd.f32 %v261, %v381
  %v383 = vpop.f32.mrb[0].mxu0
  %v384 = vpop.f32.mrb[0].mxu0
  %v385 = vadd.f32 %v261, %v384
  %v386 = vpop.f32.mrb[0].mxu0
  %387 = vmatprep.mubr.bf16.mxu0 0
  %388 = vmatmul.mubr.bf16.gmra.mrb[0].mxu0 %v297
  %v389 = vpop.f32.mrb[0].mxu0
  %v390 = vadd.f32 %v261, %v389
  %v391 = vpop.f32.mrb[0].mxu0
  %v392 = vpop.f32.mrb[0].mxu0
  %v393 = vadd.f32 %v261, %v392
  %v394 = vpop.f32.mrb[0].mxu0
  %395 = vdwg.mxu0
  %v396 = vmax.f32 %v334, 0.0
  %v397 = vmax.f32 %v337, 0.0
  %v398 = vmax.f32 %v342, 0.0
  %v399 = vmax.f32 %v345, 0.0
  %v400 = vmax.f32 %v350, 0.0
  %v401 = vmax.f32 %v353, 0.0
  %v402 = vmax.f32 %v358, 0.0
  %v403 = vmax.f32 %v361, 0.0
  %v404 = vmax.f32 %v366, 0.0
  %v405 = vmax.f32 %v369, 0.0
  %v406 = vmax.f32 %v374, 0.0
  %v407 = vmax.f32 %v377, 0.0
  %v408 = vmax.f32 %v382, 0.0
  %v409 = vmax.f32 %v385, 0.0
  %v410 = vmax.f32 %v390, 0.0
  %v411 = vmax.f32 %v393, 0.0
  %v412 = vpack.c.bf16 %v397, %v396
  %v413 = vpack.c.bf16 %v399, %v398
  %v414 = vpack.c.bf16 %v401, %v400
  %v415 = vpack.c.bf16 %v403, %v402
  %v416 = vpack.c.bf16 %v405, %v404
  %v417 = vpack.c.bf16 %v407, %v406
  %v418 = vpack.c.bf16 %v409, %v408
  %v419 = vpack.c.bf16 %v411, %v410
  %v420 = vld [vmem:[%s5] sm:$0xf]
  %v421 = vld [vmem:[%s5 + $0x4] sm:$0xf]
  %v422 = vld [vmem:[%s5 + $0x8] sm:$0xf]
  %v423 = vld [vmem:[%s5 + $0xc] sm:$0xf]
  %v424 = vld [vmem:[%s6] sm:$0x1]
  %v426 = vlaneseq
  %v427 = vshrl.u32 %v426, 7
  %v428 = vsub.s32 0, %v427
  %v429 = vrot.slane %v424, %v428
  %v435 = vunpack.c.l.b16 %v420
  %v436 = vunpack.c.l.b16 %v421
  %v437 = vunpack.c.l.b16 %v422
  %v438 = vunpack.c.l.b16 %v423
  %v439 = vpack.c.b16 %v436, %v435
  %v440 = vpack.c.b16 %v438, %v437
  %v444 = vsel %vm106, %v412, 0
  %v447 = vsel %vm106, %v413, 0
  %v450 = vsel %vm106, %v414, 0
  %v453 = vsel %vm106, %v415, 0
  %v456 = vsel %vm106, %v416, 0
  %v459 = vsel %vm106, %v417, 0
  %v462 = vsel %vm106, %v418, 0
  %v465 = vsel %vm106, %v419, 0
  %467 = vmatprep.subr.bf16.mxu0 0
  %468 = vmatpush1.bf16.msra.mxu0 %v439
  %469 = vmatprep.subr.bf16.mxu0 0
  %470 = vmatpush1.bf16.msra.mxu0 %v440
  %471 = vmatprep.subr.bf16.mxu0 0
  %472 = vmatpush1.bf16.msra.mxu0 0
  %473 = vmatprep.subr.bf16.mxu0 0
  %474 = vmatpush1.bf16.msra.mxu0 0
  %475 = vmatprep.subr.bf16.mxu0 0
  %476 = vmatpush1.bf16.msra.mxu0 0
  %477 = vmatprep.subr.bf16.mxu0 0
  %478 = vmatpush1.bf16.msra.mxu0 0
  %479 = vmatprep.subr.bf16.mxu0 0
  %480 = vmatpush1.bf16.msra.mxu0 0
  %481 = vmatprep.subr.bf16.mxu0 0
  %482 = vmatpush1.bf16.msra.mxu0 0
  %483 = vmatprep.subr.bf16.mxu0 0
  %484 = vmatpush1.bf16.msra.mxu0 0
  %485 = vmatprep.subr.bf16.mxu0 0
  %486 = vmatpush1.bf16.msra.mxu0 0
  %487 = vmatprep.subr.bf16.mxu0 0
  %488 = vmatpush1.bf16.msra.mxu0 0
  %489 = vmatprep.subr.bf16.mxu0 0
  %490 = vmatpush1.bf16.msra.mxu0 0
  %491 = vmatprep.subr.bf16.mxu0 0
  %492 = vmatpush1.bf16.msra.mxu0 0
  %493 = vmatprep.subr.bf16.mxu0 0
  %494 = vmatpush1.bf16.msra.mxu0 0
  %495 = vmatprep.subr.bf16.mxu0 0
  %496 = vmatpush1.bf16.msra.mxu0 0
  %497 = vmatprep.subr.bf16.mxu0 0
  %498 = vmatpush1.bf16.msra.mxu0 0
  %499 = vmatprep.mubr.bf16.mxu0 0
  %500 = vmatmul.mubr.bf16.gmra.mrb[0].mxu0 %v444
  %v501 = vpop.f32.mrb[0].mxu0
  %v502 = vadd.f32 %v429, %v501
  %v503 = vpop.f32.mrb[0].mxu0
  %v504 = vpop.f32.mrb[0].mxu0
  %v505 = vadd.f32 %v429, %v504
  %v506 = vpop.f32.mrb[0].mxu0
  %507 = vmatprep.mubr.bf16.mxu0 0
  %508 = vmatmul.mubr.bf16.gmra.mrb[0].mxu0 %v447
  %v509 = vpop.f32.mrb[0].mxu0
  %v510 = vadd.f32 %v429, %v509
  %v511 = vpop.f32.mrb[0].mxu0
  %v512 = vpop.f32.mrb[0].mxu0
  %v513 = vadd.f32 %v429, %v512
  %v514 = vpop.f32.mrb[0].mxu0
  %515 = vmatprep.mubr.bf16.mxu0 0
  %516 = vmatmul.mubr.bf16.gmra.mrb[0].mxu0 %v450
  %v517 = vpop.f32.mrb[0].mxu0
  %v518 = vadd.f32 %v429, %v517
  %v519 = vpop.f32.mrb[0].mxu0
  %v520 = vpop.f32.mrb[0].mxu0
  %v521 = vadd.f32 %v429, %v520
  %v522 = vpop.f32.mrb[0].mxu0
  %523 = vmatprep.mubr.bf16.mxu0 0
  %524 = vmatmul.mubr.bf16.gmra.mrb[0].mxu0 %v453
  %v525 = vpop.f32.mrb[0].mxu0
  %v526 = vadd.f32 %v429, %v525
  %v527 = vpop.f32.mrb[0].mxu0
  %v528 = vpop.f32.mrb[0].mxu0
  %v529 = vadd.f32 %v429, %v528
  %v530 = vpop.f32.mrb[0].mxu0
  %531 = vmatprep.mubr.bf16.mxu0 0
  %532 = vmatmul.mubr.bf16.gmra.mrb[0].mxu0 %v456
  %v533 = vpop.f32.mrb[0].mxu0
  %v534 = vadd.f32 %v429, %v533
  %v535 = vpop.f32.mrb[0].mxu0
  %v536 = vpop.f32.mrb[0].mxu0
  %v537 = vadd.f32 %v429, %v536
  %v538 = vpop.f32.mrb[0].mxu0
  %539 = vmatprep.mubr.bf16.mxu0 0
  %540 = vmatmul.mubr.bf16.gmra.mrb[0].mxu0 %v459
  %v541 = vpop.f32.mrb[0].mxu0
  %v542 = vadd.f32 %v429, %v541
  %v543 = vpop.f32.mrb[0].mxu0
  %v544 = vpop.f32.mrb[0].mxu0
  %v545 = vadd.f32 %v429, %v544
  %v546 = vpop.f32.mrb[0].mxu0
  %547 = vmatprep.mubr.bf16.mxu0 0
  %548 = vmatmul.mubr.bf16.gmra.mrb[0].mxu0 %v462
  %v549 = vpop.f32.mrb[0].mxu0
  %v550 = vadd.f32 %v429, %v549
  %v551 = vpop.f32.mrb[0].mxu0
  %v552 = vpop.f32.mrb[0].mxu0
  %v553 = vadd.f32 %v429, %v552
  %v554 = vpop.f32.mrb[0].mxu0
  %555 = vmatprep.mubr.bf16.mxu0 0
  %556 = vmatmul.mubr.bf16.gmra.mrb[0].mxu0 %v465
  %v557 = vpop.f32.mrb[0].mxu0
  %v558 = vadd.f32 %v429, %v557
  %v559 = vpop.f32.mrb[0].mxu0
  %v560 = vpop.f32.mrb[0].mxu0
  %v561 = vadd.f32 %v429, %v560
  %v562 = vpop.f32.mrb[0].mxu0
  %563 = vdwg.mxu0
  %vm564 = vcmask 130048
  %565 = vst.msk [vmem:[%s7] sm:$0xff] %vm564, %v502
  %566 = vst.msk [vmem:[%s7 + $0x8] sm:$0xff] %vm564, %v505
  %567 = vst.msk [vmem:[%s7 + $0x10] sm:$0xff] %vm564, %v510
  %568 = vst.msk [vmem:[%s7 + $0x18] sm:$0xff] %vm564, %v513
  %569 = vst.msk [vmem:[%s7 + $0x20] sm:$0xff] %vm564, %v518
  %570 = vst.msk [vmem:[%s7 + $0x28] sm:$0xff] %vm564, %v521
  %571 = vst.msk [vmem:[%s7 + $0x30] sm:$0xff] %vm564, %v526
  %572 = vst.msk [vmem:[%s7 + $0x38] sm:$0xff] %vm564, %v529
  %573 = vst.msk [vmem:[%s7 + $0x40] sm:$0xff] %vm564, %v534
  %574 = vst.msk [vmem:[%s7 + $0x48] sm:$0xff] %vm564, %v537
  %575 = vst.msk [vmem:[%s7 + $0x50] sm:$0xff] %vm564, %v542
  %576 = vst.msk [vmem:[%s7 + $0x58] sm:$0xff] %vm564, %v545
  %577 = vst.msk [vmem:[%s7 + $0x60] sm:$0xff] %vm564, %v550
  %578 = vst.msk [vmem:[%s7 + $0x68] sm:$0xff] %vm564, %v553
  %579 = vst.msk [vmem:[%s7 + $0x70] sm:$0xff] %vm564, %v558
  %580 = vst.msk [vmem:[%s7 + $0x78] sm:$0xff] %vm564, %v561
  // Predicated region
  $region30: #{yad_forward.1} parent=0 // pred_check
    _
  $region31: #{yad_forward.1} parent=0 // pred_check_branch
    %582 = sbr.rel (0) target = $region33
  $region32: #{yad_forward.1} parent=0 // pred_region
    _
  $region33: #{yad_forward.1} parent=0 // pred_fallthru
    _
  // Predicated region
  $region34: #{yad_forward.1} parent=0 // pred_check
    _
  $region35: #{yad_forward.1} parent=0 // pred_check_branch
    %584 = sbr.rel (0) target = $region37
  $region36: #{yad_forward.1} parent=0 // pred_region
    _
  $region37: #{yad_forward.1} parent=0 // pred_fallthru
    _

</llo_original>
